<compile_context>
chip_gen: v7x
topology: tpu7x:2x2x1
jax: 0.10.0
libtpu: 0.0.40
codegen_flags: <defaults>
</compile_context>

<pallas_src>
import functools

import jax
import jax.numpy as jnp
import numpy as np
from jax.experimental import pallas as pl
from jax.experimental.pallas import tpu as pltpu

MU = 0.001


# ----------------------------------------------------------------------------- kernel
def _era5_kernel(u_ref, v_ref, dxb_ref, dytb_ref, mask_ref, out_ref):
    u = u_ref[...]
    v = v_ref[...]
    nx, ny = u.shape

    # Fused x-derivative pass:  [D1x ; MU*D2x] @ [u | v]  ->  (2Nx, 2Ny)
    uv_cols = jnp.concatenate([u, v], axis=1)                      # (Nx, 2Ny)
    x_der = jnp.dot(dxb_ref[...], uv_cols,
                    preferred_element_type=jnp.float32)            # (2Nx, 2Ny)

    # Fused y-derivative pass:  [u ; v] @ [D1y^T | MU*D2y^T]  ->  (2Nx, 2Ny)
    uv_rows = jnp.concatenate([u, v], axis=0)                      # (2Nx, Ny)
    y_der = jnp.dot(uv_rows, dytb_ref[...],
                    preferred_element_type=jnp.float32)            # (2Nx, 2Ny)

    ux = x_der[:nx, :ny]
    vx = x_der[:nx, ny:]
    mu_uxx = x_der[nx:, :ny]
    mu_vxx = x_der[nx:, ny:]

    uy = y_der[:nx, :ny]
    vy = y_der[nx:, :ny]
    mu_uyy = y_der[:nx, ny:]
    mu_vyy = y_der[nx:, ny:]

    mask = mask_ref[...]   # 1.0 in the interior, 0.0 on the boundary frame
    du = (mu_uxx + mu_uyy - u * ux - v * uy) * mask
    dv = (mu_vxx + mu_vyy - u * vx - v * vy) * mask

    out_ref[0] = du
    out_ref[1] = dv


# ----------------------------------------------------------------------------- host-side operator construction
def _diff_matrices(vec):
    """Non-uniform-grid 1st/2nd derivative matrices (2nd-order 3-pt stencils)."""
    vec = np.asarray(vec, dtype=np.float64)
    n = vec.shape[0]
    d1 = np.zeros((n, n), dtype=np.float64)
    d2 = np.zeros((n, n), dtype=np.float64)
    for i in range(1, n - 1):
        h1 = vec[i] - vec[i - 1]
        h2 = vec[i + 1] - vec[i]
        # first derivative, central, non-uniform
        d1[i, i - 1] = -h2 / (h1 * (h1 + h2))
        d1[i, i] = (h2 - h1) / (h1 * h2)
        d1[i, i + 1] = h1 / (h2 * (h1 + h2))
        # second derivative, central, non-uniform
        d2[i, i - 1] = 2.0 / (h1 * (h1 + h2))
        d2[i, i] = -2.0 / (h1 * h2)
        d2[i, i + 1] = 2.0 / (h2 * (h1 + h2))
    # one-sided boundary stencils (these rows are zeroed in the output anyway)
    h0 = vec[1] - vec[0]
    hn = vec[-1] - vec[-2]
    d1[0, 0], d1[0, 1] = -1.0 / h0, 1.0 / h0
    d1[-1, -2], d1[-1, -1] = -1.0 / hn, 1.0 / hn
    if n >= 3:
        d2[0, :] = d2[1, :]
        d2[-1, :] = d2[-2, :]
    return d1, d2


# ----------------------------------------------------------------------------- jitted pallas wrapper
@jax.jit
def _era5_forward(u, v, dx_big, dyt_big, mask):
    nx, ny = u.shape
    # 2 matmuls: (2Nx,Nx)x(Nx,2Ny) and (2Nx,Ny)x(Ny,2Ny)  + elementwise combine
    flops = 2 * (2 * nx) * nx * (2 * ny) + 2 * (2 * nx) * ny * (2 * ny) + 10 * nx * ny
    bytes_accessed = 4 * (2 * nx * ny          # u, v
                          + 2 * nx * nx        # Dx_big
                          + 2 * ny * ny        # DyT_big
                          + nx * ny            # mask
                          + 2 * nx * ny)       # output
    cost = pl.CostEstimate(flops=flops, transcendentals=0,
                           bytes_accessed=bytes_accessed)
    vspec = pl.BlockSpec(memory_space=pltpu.MemorySpace.VMEM)
    return pl.pallas_call(
        _era5_kernel,
        out_shape=jax.ShapeDtypeStruct((2, nx, ny), jnp.float32),
        in_specs=[vspec] * 5,
        out_specs=vspec,
        cost_estimate=cost,
    )(u, v, dx_big, dyt_big, mask)


# ----------------------------------------------------------------------------- module wrapper
class ERA5BasicPallas:
    def __init__(self, grid_info):
        (self.dx, self.dy, self.grid_x, self.grid_y,
         self.vector_x, self.vector_y) = grid_info
        self.mu = MU

        d1x, d2x = _diff_matrices(self.vector_x)
        d1y, d2y = _diff_matrices(self.vector_y)

        # un-fused copies kept for validation/reference
        self.d1x = jnp.asarray(d1x, jnp.float32)
        self.d2x = jnp.asarray(d2x, jnp.float32)
        self.d1y = jnp.asarray(d1y, jnp.float32)
        self.d2y = jnp.asarray(d2y, jnp.float32)

        # fused, MU-folded, pre-transposed operators (hoisted off the hot path)
        self.dx_big = jnp.asarray(
            np.concatenate([d1x, MU * d2x], axis=0), jnp.float32)        # (2Nx, Nx)
        self.dyt_big = jnp.asarray(
            np.concatenate([d1y.T, MU * d2y.T], axis=1), jnp.float32)    # (Ny, 2Ny)

        nx = int(np.asarray(self.vector_x).shape[0])
        ny = int(np.asarray(self.vector_y).shape[0])
        m = np.zeros((nx, ny), dtype=np.float32)
        m[1:-1, 1:-1] = 1.0
        self.interior_mask = jnp.asarray(m)

    def forward(self, t, state):
        del t  # unused (ODE-solver signature)
        u, v = state
        u = jnp.asarray(u, jnp.float32)
        v = jnp.asarray(v, jnp.float32)
        return _era5_forward(u, v, self.dx_big, self.dyt_big, self.interior_mask)

    __call__ = forward


# ----------------------------------------------------------------------------- numpy reference (mirrors torch module)
def _reference(u, v, d1x, d2x, d1y, d2y):
    u = np.asarray(u, np.float32)
    v = np.asarray(v, np.float32)
    d1x, d2x, d1y, d2y = map(lambda a: np.asarray(a, np.float32),
                             (d1x, d2x, d1y, d2y))
    ux, vx = d1x @ u, d1x @ v
    uxx, vxx = d2x @ u, d2x @ v
    uy, vy = u @ d1y.T, v @ d1y.T
    uyy, vyy = u @ d2y.T, v @ d2y.T
    du = -u * ux - v * uy + MU * (uxx + uyy)
    dv = -u * vx - v * vy + MU * (vxx + vyy)
    res = np.stack([du, dv])
    res[:, 0, :] = 0.0
    res[:, -1, :] = 0.0
    res[:, :, 0] = 0.0
    res[:, :, -1] = 0.0
    return res


if __name__ == "__main__":
    nx, ny = 16, 16
    # deterministic, slightly non-uniform grid
    key = jax.random.PRNGKey(0)
    kx, ky, ku, kv = jax.random.split(key, 4)
    sx = 1.0 + 0.1 * jax.random.uniform(kx, (nx,))
    sy = 1.0 + 0.1 * jax.random.uniform(ky, (ny,))
    vector_x = jnp.cumsum(sx) - sx[0]
    vector_y = jnp.cumsum(sy) - sy[0]
    dx = float(vector_x[1] - vector_x[0])
    dy = float(vector_y[1] - vector_y[0])
    grid_x, grid_y = jnp.meshgrid(vector_x, vector_y, indexing="ij")
    grid_info = (dx, dy, grid_x, grid_y, vector_x, vector_y)

    model = ERA5BasicPallas(grid_info)

    u0 = jax.random.normal(ku, (nx, ny), dtype=jnp.float32)
    v0 = jax.random.normal(kv, (nx, ny), dtype=jnp.float32)

    out = model.forward(0.0, (u0, v0))
    out = jax.block_until_ready(out)

    ref = _reference(u0, v0, model.d1x, model.d2x, model.d1y, model.d2y)
    np.testing.assert_allclose(np.asarray(out), ref, rtol=1e-4, atol=1e-5)

    print("KERNEL_OK")
</pallas_src>

<mosaic_0001>
module attributes {stable_mosaic.version = 11 : i64} {
  func.func @_era5_kernel(%arg0: memref<16x16xf32, #tpu.memory_space<vmem>>, %arg1: memref<16x16xf32, #tpu.memory_space<vmem>>, %arg2: memref<32x16xf32, #tpu.memory_space<vmem>>, %arg3: memref<16x32xf32, #tpu.memory_space<vmem>>, %arg4: memref<16x16xf32, #tpu.memory_space<vmem>>, %arg5: memref<2x16x16xf32, #tpu.memory_space<vmem>>) attributes {dimension_semantics = [], scalar_prefetch = 0 : i64, scratch_operands = 0 : i64, tpu.core_type = #tpu.core_type<tc>} {
    %c0 = arith.constant 0 : index
    %c0_0 = arith.constant 0 : index
    %0 = vector.load %arg0[%c0, %c0_0] : memref<16x16xf32, #tpu.memory_space<vmem>>, vector<16x16xf32>
    %c0_1 = arith.constant 0 : index
    %c0_2 = arith.constant 0 : index
    %1 = vector.load %arg1[%c0_1, %c0_2] : memref<16x16xf32, #tpu.memory_space<vmem>>, vector<16x16xf32>
    %2 = tpu.concatenate %0, %1 in 1 : vector<16x16xf32>, vector<16x16xf32> -> vector<16x32xf32>
    %c0_3 = arith.constant 0 : index
    %c0_4 = arith.constant 0 : index
    %3 = vector.load %arg2[%c0_3, %c0_4] : memref<32x16xf32, #tpu.memory_space<vmem>>, vector<32x16xf32>
    %cst = arith.constant dense<0.000000e+00> : vector<32x32xf32>
    %4 = tpu.matmul %3, %2, %cst {dimension_numbers = #tpu.dot_dimension_numbers<[1], [0], [0], [1], [0, 0, 1, 1], [], []>} : vector<32x16xf32>, vector<16x32xf32>, vector<32x32xf32> -> vector<32x32xf32>
    %5 = tpu.concatenate %0, %1 in 0 : vector<16x16xf32>, vector<16x16xf32> -> vector<32x16xf32>
    %c0_5 = arith.constant 0 : index
    %c0_6 = arith.constant 0 : index
    %6 = vector.load %arg3[%c0_5, %c0_6] : memref<16x32xf32, #tpu.memory_space<vmem>>, vector<16x32xf32>
    %cst_7 = arith.constant dense<0.000000e+00> : vector<32x32xf32>
    %7 = tpu.matmul %5, %6, %cst_7 {dimension_numbers = #tpu.dot_dimension_numbers<[1], [0], [0], [1], [0, 0, 1, 1], [], []>} : vector<32x16xf32>, vector<16x32xf32>, vector<32x32xf32> -> vector<32x32xf32>
    %8 = vector.extract_strided_slice %4 {offsets = [0, 0], sizes = [16, 16], strides = [1, 1]} : vector<32x32xf32> to vector<16x16xf32>
    %9 = vector.extract_strided_slice %4 {offsets = [0, 16], sizes = [16, 16], strides = [1, 1]} : vector<32x32xf32> to vector<16x16xf32>
    %10 = vector.extract_strided_slice %4 {offsets = [16, 0], sizes = [16, 16], strides = [1, 1]} : vector<32x32xf32> to vector<16x16xf32>
    %11 = vector.extract_strided_slice %4 {offsets = [16, 16], sizes = [16, 16], strides = [1, 1]} : vector<32x32xf32> to vector<16x16xf32>
    %12 = vector.extract_strided_slice %7 {offsets = [0, 0], sizes = [16, 16], strides = [1, 1]} : vector<32x32xf32> to vector<16x16xf32>
    %13 = vector.extract_strided_slice %7 {offsets = [16, 0], sizes = [16, 16], strides = [1, 1]} : vector<32x32xf32> to vector<16x16xf32>
    %14 = vector.extract_strided_slice %7 {offsets = [0, 16], sizes = [16, 16], strides = [1, 1]} : vector<32x32xf32> to vector<16x16xf32>
    %15 = vector.extract_strided_slice %7 {offsets = [16, 16], sizes = [16, 16], strides = [1, 1]} : vector<32x32xf32> to vector<16x16xf32>
    %c0_8 = arith.constant 0 : index
    %c0_9 = arith.constant 0 : index
    %16 = vector.load %arg4[%c0_8, %c0_9] : memref<16x16xf32, #tpu.memory_space<vmem>>, vector<16x16xf32>
    %17 = arith.addf %10, %14 : vector<16x16xf32>
    %18 = arith.mulf %0, %8 : vector<16x16xf32>
    %19 = arith.subf %17, %18 : vector<16x16xf32>
    %20 = arith.mulf %1, %12 : vector<16x16xf32>
    %21 = arith.subf %19, %20 : vector<16x16xf32>
    %22 = arith.mulf %21, %16 : vector<16x16xf32>
    %23 = arith.addf %11, %15 : vector<16x16xf32>
    %24 = arith.mulf %0, %9 : vector<16x16xf32>
    %25 = arith.subf %23, %24 : vector<16x16xf32>
    %26 = arith.mulf %1, %13 : vector<16x16xf32>
    %27 = arith.subf %25, %26 : vector<16x16xf32>
    %28 = arith.mulf %27, %16 : vector<16x16xf32>
    %c0_10 = arith.constant 0 : index
    %c0_11 = arith.constant 0 : index
    %c0_12 = arith.constant 0 : index
    %29 = vector.load %arg5[%c0_10, %c0_11, %c0_12] : memref<2x16x16xf32, #tpu.memory_space<vmem>>, vector<1x16x16xf32>
    %30 = vector.shape_cast %29 : vector<1x16x16xf32> to vector<16x16xf32>
    %31 = vector.shape_cast %22 : vector<16x16xf32> to vector<1x16x16xf32>
    tpu.vector_store %arg5[%c0_10, %c0_11, %c0_12], %31 {strides = array<i32>} : memref<2x16x16xf32, #tpu.memory_space<vmem>>, vector<1x16x16xf32>,
    %c1 = arith.constant 1 : index
    %c0_13 = arith.constant 0 : index
    %c0_14 = arith.constant 0 : index
    %32 = vector.load %arg5[%c1, %c0_13, %c0_14] : memref<2x16x16xf32, #tpu.memory_space<vmem>>, vector<1x16x16xf32>
    %33 = vector.shape_cast %32 : vector<1x16x16xf32> to vector<16x16xf32>
    %34 = vector.shape_cast %28 : vector<16x16xf32> to vector<1x16x16xf32>
    tpu.vector_store %arg5[%c1, %c0_13, %c0_14], %34 {strides = array<i32>} : memref<2x16x16xf32, #tpu.memory_space<vmem>>, vector<1x16x16xf32>,
    return
  }
}

</mosaic_0001>

<llo_original>
// kernel: _era5_forward.1
$region0: #{_era5_forward.1}
  #allocation0 [shape = 'u32[]', space=smem, size = 0x4, offset = 0x4, fixed_abs, tag = 'smem constant byte address 0x4 - core index']
  #allocation1 [shape = 'u32[144,128]{1,0:T(1,128)}', space=vmem, size = 0x12000, scoped, tag = 'internal scratch']
  %s0 = inlined_call_operand.vmem [shape: f32[16,16], index: 0, kind: input, shape index: {}]
  %s1 = inlined_call_operand.vmem [shape: f32[16,16], index: 1, kind: input, shape index: {}]
  %s2 = inlined_call_operand.vmem [shape: f32[32,16], index: 2, kind: input, shape index: {}]
  %s3 = inlined_call_operand.vmem [shape: f32[16,32], index: 3, kind: input, shape index: {}]
  %s4 = inlined_call_operand.hbm [shape: f32[16,16], index: 4, kind: input, shape index: {}]
  %s5 = inlined_call_operand.hbm [shape: f32[2,16,16], index: 5, kind: output, shape index: {}]
  %s6 = sld [smem:[#allocation0]]
  $region34: #{_era5_forward.1} parent=0
    _
  %s8 = ssub.s32 1, %s6
  %s9 = scalar_select 0, %s8, %s6
  $region1: #{_era5_forward.1} parent=0
    #allocation2 [shape = 'u8[8192]{0}', space=vmem, size = 0x2000, scoped, tag = 'input window, operand 4, single buffered']
    #allocation3 [shape = 's32[1]{0}', space=sflag, size = 0x4, scoped, tag = 'scoped memory for _era5_forward.1']
    #allocation4 [shape = 's32[1]{0}', space=sflag, size = 0x4, scoped, tag = 'scoped memory for _era5_forward.1']
    #allocation5 [shape = 'u8[16384]{0}', space=vmem, size = 0x4000, scoped, tag = 'output window, operand 0, single buffered']
    %10 = vsyncpa [#allocation3], 0
    %11 = vsyncpa [#allocation4], 0
    // Predicated region
    $region2: #{_era5_forward.1} parent=1 // pred_check
      _
    $region3: #{_era5_forward.1} parent=1 // pred_check_branch
      %13 = sbr.rel (0) target = $region5
    $region4: #{_era5_forward.1} parent=1 // pred_region
      _
    $region5: #{_era5_forward.1} parent=1 // pred_fallthru
      _
    // Predicated region
    $region6: #{_era5_forward.1} parent=1 // pred_check
      _
    $region7: #{_era5_forward.1} parent=1 // pred_check_branch
      %15 = sbr.rel (0) target = $region9
    $region8: #{_era5_forward.1} parent=1 // pred_region
      _
    $region9: #{_era5_forward.1} parent=1 // pred_fallthru
      _
    // Predicated region
    $region10: #{_era5_forward.1} parent=1 // pred_check
      _
    $region11: #{_era5_forward.1} parent=1 // pred_check_branch
      %17 = sbr.rel (0) target = $region13
    $region12: #{_era5_forward.1} parent=1 // pred_region
      _
    $region13: #{_era5_forward.1} parent=1 // pred_fallthru
      _
    // Predicated region
    $region14: #{_era5_forward.1} parent=1 // pred_check
      _
    $region15: #{_era5_forward.1} parent=1 // pred_check_branch
      %19 = sbr.rel (0) target = $region17
    $region16: #{_era5_forward.1} parent=1 // pred_region
      _
    $region17: #{_era5_forward.1} parent=1 // pred_fallthru
      _
    // Predicated region
    $region18: #{_era5_forward.1} parent=1 // pred_check
      _
    $region19: #{_era5_forward.1} parent=1 // pred_check_branch
      %21 = sbr.rel (0) target = $region21
    $region20: #{_era5_forward.1} parent=1 // pred_region
      %s23 = ssub.s32 256, 256
      %24 = vsyncadd [#allocation3], %s23
      %s25 = sshll.u32 [#allocation2], 4
      %s26 = int_to_ptr.vmem [resolvable:$true] %s25
      %31 = dma.hbm_to_vmem [thread:$0]  %s4, 256, %s26, [#allocation3], 128, 128, 8
    $region21: #{_era5_forward.1} parent=1 // pred_fallthru
      _
    // Predicated region
    $region22: #{_era5_forward.1} parent=1 // pred_check
      _
    $region23: #{_era5_forward.1} parent=1 // pred_check_branch
      %33 = sbr.rel (0) target = $region25
    $region24: #{_era5_forward.1} parent=1 // pred_region
      %34 = dma.done [#allocation3], 256
    $region25: #{_era5_forward.1} parent=1 // pred_fallthru
      _
    %v35 = vld [vmem:[%s0] sm:$0xff]
    %v36 = vld [vmem:[%s0 + $0x8] sm:$0xff]
    %v37 = vld [vmem:[%s1] sm:$0xff]
    %v38 = vld [vmem:[%s1 + $0x8] sm:$0xff]
    %41 = vrot.lane.b32.xlu0 %v37, 16
    %v42 = vpop.permute.xlu0 %41
    %43 = vrot.lane.b32.xlu0 %v38, 16
    %v44 = vpop.permute.xlu0 %43
    %vm47 = vcmask 130048
    %v48 = vsel %vm47, %v35, %v42
    %v49 = vsel %vm47, %v36, %v44
    %v50 = vld [vmem:[%s2] sm:$0xff]
    %v51 = vld [vmem:[%s2 + $0x8] sm:$0xff]
    %v52 = vld [vmem:[%s2 + $0x10] sm:$0xff]
    %v53 = vld [vmem:[%s2 + $0x18] sm:$0xff]
    %v55 = vsel %vm47, %v50, 0
    %v58 = vsel %vm47, %v51, 0
    %v61 = vsel %vm47, %v52, 0
    %v64 = vsel %vm47, %v53, 0
    %66 = vmatprep.subr.mxu0 0.0
    %67 = vmatpush1.msra.mxu0 %v48
    %68 = vmatprep.subr.mxu0 0.0
    %69 = vmatpush1.msra.mxu0 %v49
    %70 = vmatprep.subr.mxu0 0.0
    %71 = vmatpush1.msra.mxu0 0.0
    %72 = vmatprep.subr.mxu0 0.0
    %73 = vmatpush1.msra.mxu0 0.0
    %74 = vmatprep.subr.mxu0 0.0
    %75 = vmatpush1.msra.mxu0 0.0
    %76 = vmatprep.subr.mxu0 0.0
    %77 = vmatpush1.msra.mxu0 0.0
    %78 = vmatprep.subr.mxu0 0.0
    %79 = vmatpush1.msra.mxu0 0.0
    %80 = vmatprep.subr.mxu0 0.0
    %81 = vmatpush1.msra.mxu0 0.0
    %82 = vmatprep.subr.mxu0 0.0
    %83 = vmatpush1.msra.mxu0 0.0
    %84 = vmatprep.subr.mxu0 0.0
    %85 = vmatpush1.msra.mxu0 0.0
    %86 = vmatprep.subr.mxu0 0.0
    %87 = vmatpush1.msra.mxu0 0.0
    %88 = vmatprep.subr.mxu0 0.0
    %89 = vmatpush1.msra.mxu0 0.0
    %90 = vmatprep.subr.mxu0 0.0
    %91 = vmatpush1.msra.mxu0 0.0
    %92 = vmatprep.subr.mxu0 0.0
    %93 = vmatpush1.msra.mxu0 0.0
    %94 = vmatprep.subr.mxu0 0.0
    %95 = vmatpush1.msra.mxu0 0.0
    %96 = vmatprep.subr.mxu0 0.0
    %97 = vmatpush1.msra.mxu0 0.0
    %98 = vmatprep.subr.mxu0 0.0
    %99 = vmatpush1.msra.mxu0 0.0
    %100 = vmatprep.subr.mxu0 0.0
    %101 = vmatpush1.msra.mxu0 0.0
    %102 = vmatprep.subr.mxu0 0.0
    %103 = vmatpush1.msra.mxu0 0.0
    %104 = vmatprep.subr.mxu0 0.0
    %105 = vmatpush1.msra.mxu0 0.0
    %106 = vmatprep.subr.mxu0 0.0
    %107 = vmatpush1.msra.mxu0 0.0
    %108 = vmatprep.subr.mxu0 0.0
    %109 = vmatpush1.msra.mxu0 0.0
    %110 = vmatprep.subr.mxu0 0.0
    %111 = vmatpush1.msra.mxu0 0.0
    %112 = vmatprep.subr.mxu0 0.0
    %113 = vmatpush1.msra.mxu0 0.0
    %114 = vmatprep.subr.mxu0 0.0
    %115 = vmatpush1.msra.mxu0 0.0
    %116 = vmatprep.subr.mxu0 0.0
    %117 = vmatpush1.msra.mxu0 0.0
    %118 = vmatprep.subr.mxu0 0.0
    %119 = vmatpush1.msra.mxu0 0.0
    %120 = vmatprep.subr.mxu0 0.0
    %121 = vmatpush1.msra.mxu0 0.0
    %122 = vmatprep.subr.mxu0 0.0
    %123 = vmatpush1.msra.mxu0 0.0
    %124 = vmatprep.subr.mxu0 0.0
    %125 = vmatpush1.msra.mxu0 0.0
    %126 = vmatprep.subr.mxu0 0.0
    %127 = vmatpush1.msra.mxu0 0.0
    %128 = vmatprep.subr.mxu0 0.0
    %129 = vmatpush1.msra.mxu0 0.0
    %130 = vmatprep.mubr.f32.mxu0 0.0
    %131 = vmatmul.mubr.f32.gmra.mrb[0].mxu0 %v55
    %v132 = vpop.f32.mrb[0].mxu0
    %v133 = vadd.f32 0.0, %v132
    %v134 = vpop.f32.mrb[0].mxu0
    %135 = vmatprep.mubr.f32.mxu0 0.0
    %136 = vmatmul.mubr.f32.gmra.mrb[0].mxu0 %v58
    %v137 = vpop.f32.mrb[0].mxu0
    %v138 = vadd.f32 0.0, %v137
    %v139 = vpop.f32.mrb[0].mxu0
    %140 = vmatprep.mubr.f32.mxu0 0.0
    %141 = vmatmul.mubr.f32.gmra.mrb[0].mxu0 %v61
    %v142 = vpop.f32.mrb[0].mxu0
    %v143 = vadd.f32 0.0, %v142
    %v144 = vpop.f32.mrb[0].mxu0
    %145 = vmatprep.mubr.f32.mxu0 0.0
    %146 = vmatmul.mubr.f32.gmra.mrb[0].mxu0 %v64
    %v147 = vpop.f32.mrb[0].mxu0
    %v148 = vadd.f32 0.0, %v147
    %v149 = vpop.f32.mrb[0].mxu0
    %150 = vdwg.mxu0
    %v151 = vld [vmem:[%s3] sm:$0xff]
    %v152 = vld [vmem:[%s3 + $0x8] sm:$0xff]
    %v154 = vsel %vm47, %v35, 0
    %v157 = vsel %vm47, %v36, 0
    %v159 = vsel %vm47, %v37, 0
    %v161 = vsel %vm47, %v38, 0
    %163 = vmatprep.subr.mxu0 0.0
    %164 = vmatpush1.msra.mxu0 %v151
    %165 = vmatprep.subr.mxu0 0.0
    %166 = vmatpush1.msra.mxu0 %v152
    %167 = vmatprep.subr.mxu0 0.0
    %168 = vmatpush1.msra.mxu0 0.0
    %169 = vmatprep.subr.mxu0 0.0
    %170 = vmatpush1.msra.mxu0 0.0
    %171 = vmatprep.subr.mxu0 0.0
    %172 = vmatpush1.msra.mxu0 0.0
    %173 = vmatprep.subr.mxu0 0.0
    %174 = vmatpush1.msra.mxu0 0.0
    %175 = vmatprep.subr.mxu0 0.0
    %176 = vmatpush1.msra.mxu0 0.0
    %177 = vmatprep.subr.mxu0 0.0
    %178 = vmatpush1.msra.mxu0 0.0
    %179 = vmatprep.subr.mxu0 0.0
    %180 = vmatpush1.msra.mxu0 0.0
    %181 = vmatprep.subr.mxu0 0.0
    %182 = vmatpush1.msra.mxu0 0.0
    %183 = vmatprep.subr.mxu0 0.0
    %184 = vmatpush1.msra.mxu0 0.0
    %185 = vmatprep.subr.mxu0 0.0
    %186 = vmatpush1.msra.mxu0 0.0
    %187 = vmatprep.subr.mxu0 0.0
    %188 = vmatpush1.msra.mxu0 0.0
    %189 = vmatprep.subr.mxu0 0.0
    %190 = vmatpush1.msra.mxu0 0.0
    %191 = vmatprep.subr.mxu0 0.0
    %192 = vmatpush1.msra.mxu0 0.0
    %193 = vmatprep.subr.mxu0 0.0
    %194 = vmatpush1.msra.mxu0 0.0
    %195 = vmatprep.subr.mxu0 0.0
    %196 = vmatpush1.msra.mxu0 0.0
    %197 = vmatprep.subr.mxu0 0.0
    %198 = vmatpush1.msra.mxu0 0.0
    %199 = vmatprep.subr.mxu0 0.0
    %200 = vmatpush1.msra.mxu0 0.0
    %201 = vmatprep.subr.mxu0 0.0
    %202 = vmatpush1.msra.mxu0 0.0
    %203 = vmatprep.subr.mxu0 0.0
    %204 = vmatpush1.msra.mxu0 0.0
    %205 = vmatprep.subr.mxu0 0.0
    %206 = vmatpush1.msra.mxu0 0.0
    %207 = vmatprep.subr.mxu0 0.0
    %208 = vmatpush1.msra.mxu0 0.0
    %209 = vmatprep.subr.mxu0 0.0
    %210 = vmatpush1.msra.mxu0 0.0
    %211 = vmatprep.subr.mxu0 0.0
    %212 = vmatpush1.msra.mxu0 0.0
    %213 = vmatprep.subr.mxu0 0.0
    %214 = vmatpush1.msra.mxu0 0.0
    %215 = vmatprep.subr.mxu0 0.0
    %216 = vmatpush1.msra.mxu0 0.0
    %217 = vmatprep.subr.mxu0 0.0
    %218 = vmatpush1.msra.mxu0 0.0
    %219 = vmatprep.subr.mxu0 0.0
    %220 = vmatpush1.msra.mxu0 0.0
    %221 = vmatprep.subr.mxu0 0.0
    %222 = vmatpush1.msra.mxu0 0.0
    %223 = vmatprep.subr.mxu0 0.0
    %224 = vmatpush1.msra.mxu0 0.0
    %225 = vmatprep.subr.mxu0 0.0
    %226 = vmatpush1.msra.mxu0 0.0
    %227 = vmatprep.mubr.f32.mxu0 0.0
    %228 = vmatmul.mubr.f32.gmra.mrb[0].mxu0 %v154
    %v229 = vpop.f32.mrb[0].mxu0
    %v230 = vadd.f32 0.0, %v229
    %v231 = vpop.f32.mrb[0].mxu0
    %232 = vmatprep.mubr.f32.mxu0 0.0
    %233 = vmatmul.mubr.f32.gmra.mrb[0].mxu0 %v157
    %v234 = vpop.f32.mrb[0].mxu0
    %v235 = vadd.f32 0.0, %v234
    %v236 = vpop.f32.mrb[0].mxu0
    %237 = vmatprep.mubr.f32.mxu0 0.0
    %238 = vmatmul.mubr.f32.gmra.mrb[0].mxu0 %v159
    %v239 = vpop.f32.mrb[0].mxu0
    %v240 = vadd.f32 0.0, %v239
    %v241 = vpop.f32.mrb[0].mxu0
    %242 = vmatprep.mubr.f32.mxu0 0.0
    %243 = vmatmul.mubr.f32.gmra.mrb[0].mxu0 %v161
    %v244 = vpop.f32.mrb[0].mxu0
    %v245 = vadd.f32 0.0, %v244
    %v246 = vpop.f32.mrb[0].mxu0
    %247 = vdwg.mxu0
    %v248 = vld [vmem:[#allocation2] sm:$0xff]
    %v249 = vld [vmem:[#allocation2 + $0x8] sm:$0xff]
    %252 = vrot.lane.b32.xlu0 %v230, 112
    %v253 = vpop.permute.xlu0 %252
    %254 = vrot.lane.b32.xlu0 %v235, 112
    %v255 = vpop.permute.xlu0 %254
    %v258 = vadd.f32 %v143, %v253
    %v259 = vadd.f32 %v148, %v255
    %v260 = vmul.f32 %v35, %v133
    %v261 = vmul.f32 %v36, %v138
    %v262 = vsub.f32 %v258, %v260
    %v263 = vsub.f32 %v259, %v261
    %v264 = vmul.f32 %v37, %v230
    %v265 = vmul.f32 %v38, %v235
    %v266 = vsub.f32 %v262, %v264
    %v267 = vsub.f32 %v263, %v265
    %v268 = vmul.f32 %v266, %v248
    %v269 = vmul.f32 %v267, %v249
    %v270 = vadd.f32 %v143, %v240
    %v271 = vadd.f32 %v148, %v245
    %274 = vrot.lane.b32.xlu0 %v133, 112
    %v275 = vpop.permute.xlu0 %274
    %276 = vrot.lane.b32.xlu0 %v138, 112
    %v277 = vpop.permute.xlu0 %276
    %v280 = vmul.f32 %v35, %v275
    %v281 = vmul.f32 %v36, %v277
    %284 = vrot.lane.b32.xlu0 %v280, 16
    %v285 = vpop.permute.xlu0 %284
    %286 = vrot.lane.b32.xlu0 %v281, 16
    %v287 = vpop.permute.xlu0 %286
    %v290 = vsub.f32 %v270, %v285
    %v291 = vsub.f32 %v271, %v287
    %v292 = vmul.f32 %v37, %v240
    %v293 = vmul.f32 %v38, %v245
    %296 = vrot.lane.b32.xlu0 %v292, 16
    %v297 = vpop.permute.xlu0 %296
    %298 = vrot.lane.b32.xlu0 %v293, 16
    %v299 = vpop.permute.xlu0 %298
    %v302 = vsub.f32 %v290, %v297
    %v303 = vsub.f32 %v291, %v299
    %306 = vrot.lane.b32.xlu0 %v248, 16
    %v307 = vpop.permute.xlu0 %306
    %308 = vrot.lane.b32.xlu0 %v249, 16
    %v309 = vpop.permute.xlu0 %308
    %v312 = vmul.f32 %v302, %v307
    %v313 = vmul.f32 %v303, %v309
    %314 = vst.msk [vmem:[#allocation5] sm:$0xff] %vm47, %v268
    %315 = vst.msk [vmem:[#allocation5 + $0x8] sm:$0xff] %vm47, %v269
    %318 = vrot.lane.b32.xlu0 %v312, 112
    %v319 = vpop.permute.xlu0 %318
    %320 = vrot.lane.b32.xlu0 %v313, 112
    %v321 = vpop.permute.xlu0 %320
    %s324 = scalar_lea.vmem [#allocation5], 16
    %325 = vst.msk [vmem:[%s324] sm:$0xff] %vm47, %v319
    %326 = vst.msk [vmem:[%s324 + $0x8] sm:$0xff] %vm47, %v321
    // Predicated region
    $region26: #{_era5_forward.1} parent=1 // pred_check
      _
    $region27: #{_era5_forward.1} parent=1 // pred_check_branch
      %328 = sbr.rel (0) target = $region29
    $region28: #{_era5_forward.1} parent=1 // pred_region
      %s330 = ssub.s32 512, 512
      %331 = vsyncadd [#allocation4], %s330
      %s332 = sshll.u32 [#allocation5], 4
      %s333 = int_to_ptr.vmem [resolvable:$true] %s332
      %338 = dma.vmem_to_hbm [thread:$0]  %s333, 512, %s5, [#allocation4], 128, 128, 8
    $region29: #{_era5_forward.1} parent=1 // pred_fallthru
      _
    // Predicated region
    $region30: #{_era5_forward.1} parent=1 // pred_check
      _
    $region31: #{_era5_forward.1} parent=1 // pred_check_branch
      %340 = sbr.rel (0) target = $region33
    $region32: #{_era5_forward.1} parent=1 // pred_region
      %341 = dma.done [#allocation4], 512
    $region33: #{_era5_forward.1} parent=1 // pred_fallthru
      _
    %342 = vsyncpa [#allocation3], 1
    %343 = vsyncpa [#allocation4], 1

</llo_original>
